<compile_context>
chip_gen: v7x
topology: tpu7x:2x2x1
jax: 0.10.0
libtpu: 0.0.40
codegen_flags: <defaults>
</compile_context>

<pallas_src>
import functools

import jax
import jax.numpy as jnp
import numpy as np
from jax.experimental import pallas as pl
from jax.experimental.pallas import tpu as pltpu

NUM_CLASSES = 9
IN_FEATS = 6      # [x1, y1, x2, y2, prob, class]
OUT_FEATS = 11    # [x1, y1, x2, y2, c1, c2, c3, s1, s2, s3, prob]
MAX_TILE = 8192   # lanes (objects) per grid step; in+out ~0.57 MiB / step


def _preprocess_kernel(x_ref, out_ref, *, inv_img_size):
    # x_ref block: (6, T) feature-major, T a multiple of 128 (lane axis).
    x = x_ref[...]                                        # (6, T) f32
    t = x.shape[1]

    xyxy = x[0:4, :] * jnp.float32(inv_img_size)          # (4, T)
    prob = x[4:5, :]                                      # (1, T)
    cls = x[5:6, :].astype(jnp.int32)                     # (1, T)

    # cls // 3 and cls % 3 without integer division (VPU compares only).
    ge3 = (cls >= 3).astype(jnp.int32)
    ge6 = (cls >= 6).astype(jnp.int32)
    color_id = ge3 + ge6                                  # 0: red, 1: yellow, 2: blue
    shape_id = cls - color_id * 3                         # 0: square, 1: circle, 2: triangle

    j = jax.lax.broadcasted_iota(jnp.int32, (3, t), 0)    # sublane index 0..2
    zero = jnp.float32(0.0)
    color = jnp.where(color_id == j, prob, zero)          # (3, T)
    shape = jnp.where(shape_id == j, prob, zero)          # (3, T)

    # Direct sublane-slice writes; lane axis stays fully dense/unmasked.
    out_ref[0:4, :] = xyxy
    out_ref[4:7, :] = color
    out_ref[7:10, :] = shape
    out_ref[10:11, :] = prob


def _round_up(v, m):
    return pl.cdiv(v, m) * m


def fcnn_preprocess(x, img_size=128):
    """x: (B, N, 6) YOLO-style detections -> (B, N, 11) object-centric Z."""
    B, N, F = x.shape
    assert F == IN_FEATS
    total = B * N

    xf = x if x.dtype == jnp.float32 else x.astype(jnp.float32)
    # Feature-major, lane-dense slab: (6, B*N); pad object axis to the tile size.
    xt = jnp.transpose(xf.reshape(total, IN_FEATS), (1, 0))       # (6, total)
    tile = min(MAX_TILE, _round_up(total, 128))
    padded = _round_up(total, tile)
    if padded > total:
        xt = jnp.pad(xt, ((0, 0), (0, padded - total)))

    kernel = functools.partial(_preprocess_kernel,
                               inv_img_size=1.0 / float(img_size))
    out_t = pl.pallas_call(
        kernel,
        out_shape=jax.ShapeDtypeStruct((OUT_FEATS, padded), jnp.float32),
        grid=(padded // tile,),
        in_specs=[pl.BlockSpec((IN_FEATS, tile), lambda i: (0, i))],
        out_specs=pl.BlockSpec((OUT_FEATS, tile), lambda i: (0, i)),
        compiler_params=pltpu.CompilerParams(
            dimension_semantics=("parallel",)),
    )(xt)

    z = jnp.transpose(out_t[:, :total], (1, 0)).reshape(B, N, OUT_FEATS)
    return z


def reference(x, img_size=128):
    # Pure-JAX reference mirroring the PyTorch forward (table gather).
    colors = jnp.asarray(
        np.array([[1, 0, 0]] * 3 + [[0, 1, 0]] * 3 + [[0, 0, 1]] * 3,
                 dtype=np.float32))
    shapes = jnp.asarray(
        np.array([[1, 0, 0], [0, 1, 0], [0, 0, 1]] * 3, dtype=np.float32))
    xyxy = x[..., 0:4] / img_size
    prob = x[..., 4:5]
    cls = x[..., 5].astype(jnp.int32)
    color = colors[cls] * prob
    shape = shapes[cls] * prob
    return jnp.concatenate([xyxy, color, shape, prob], axis=-1)


if __name__ == "__main__":
    key = jax.random.PRNGKey(0)
    B, N = 2, 8
    img_size = 128
    k1, k2, k3 = jax.random.split(key, 3)
    boxes = jax.random.uniform(k1, (B, N, 4), jnp.float32, 0.0, float(img_size))
    prob = jax.random.uniform(k2, (B, N, 1), jnp.float32)
    cls = jax.random.randint(k3, (B, N, 1), 0, NUM_CLASSES).astype(jnp.float32)
    x = jnp.concatenate([boxes, prob, cls], axis=-1)   # (B, N, 6)

    out = jax.block_until_ready(fcnn_preprocess(x, img_size))
    ref = reference(x, img_size)

    assert out.shape == (B, N, OUT_FEATS)
    np.testing.assert_allclose(np.asarray(out), np.asarray(ref),
                               rtol=1e-5, atol=1e-5)
    print("KERNEL_OK")
</pallas_src>

<mosaic_0001>
module attributes {stable_mosaic.version = 11 : i64} {
  func.func @_preprocess_kernel(%arg0: i32, %arg1: memref<6x128xf32, #tpu.memory_space<vmem>>, %arg2: memref<11x128xf32, #tpu.memory_space<vmem>>) attributes {dimension_semantics = [#tpu.dimension_semantics<parallel>], iteration_bounds = array<i64: 1>, scalar_prefetch = 0 : i64, scratch_operands = 0 : i64, tpu.core_type = #tpu.core_type<tc>, window_params = [{transform_indices = @transform_0, window_bounds = array<i64: 6, 128>}, {transform_indices = @transform_1, window_bounds = array<i64: 11, 128>}]} {
    %c0 = arith.constant 0 : index
    %c0_0 = arith.constant 0 : index
    %0 = vector.load %arg1[%c0, %c0_0] : memref<6x128xf32, #tpu.memory_space<vmem>>, vector<6x128xf32>
    %1 = vector.extract_strided_slice %0 {offsets = [0, 0], sizes = [4, 128], strides = [1, 1]} : vector<6x128xf32> to vector<4x128xf32>
    %cst = arith.constant 7.812500e-03 : f32
    %2 = vector.broadcast %cst : f32 to vector<4x128xf32>
    %3 = arith.mulf %1, %2 : vector<4x128xf32>
    %4 = vector.extract_strided_slice %0 {offsets = [4, 0], sizes = [1, 128], strides = [1, 1]} : vector<6x128xf32> to vector<1x128xf32>
    %5 = vector.extract_strided_slice %0 {offsets = [5, 0], sizes = [1, 128], strides = [1, 1]} : vector<6x128xf32> to vector<1x128xf32>
    %6 = arith.fptosi %5 : vector<1x128xf32> to vector<1x128xi32>
    %c3_i32 = arith.constant 3 : i32
    %7 = vector.broadcast %c3_i32 : i32 to vector<1x128xi32>
    %8 = arith.cmpi sge, %6, %7 : vector<1x128xi32>
    %9 = arith.extui %8 : vector<1x128xi1> to vector<1x128xi32>
    %c6_i32 = arith.constant 6 : i32
    %10 = vector.broadcast %c6_i32 : i32 to vector<1x128xi32>
    %11 = arith.cmpi sge, %6, %10 : vector<1x128xi32>
    %12 = arith.extui %11 : vector<1x128xi1> to vector<1x128xi32>
    %13 = arith.addi %9, %12 : vector<1x128xi32>
    %c3_i32_1 = arith.constant 3 : i32
    %14 = vector.broadcast %c3_i32_1 : i32 to vector<1x128xi32>
    %15 = arith.muli %13, %14 : vector<1x128xi32>
    %16 = arith.subi %6, %15 : vector<1x128xi32>
    %17 = tpu.iota {dimensions = array<i32: 0>} : vector<3x128xi32>
    %18 = vector.broadcast %13 : vector<1x128xi32> to vector<3x128xi32>
    %19 = arith.cmpi eq, %18, %17 : vector<3x128xi32>
    %cst_2 = arith.constant 0.000000e+00 : f32
    %20 = vector.shape_cast %4 : vector<1x128xf32> to vector<1x128xf32>
    %21 = vector.broadcast %20 : vector<1x128xf32> to vector<3x128xf32>
    %22 = vector.broadcast %cst_2 : f32 to vector<3x128xf32>
    %23 = arith.select %19, %21, %22 : vector<3x128xi1>, vector<3x128xf32>
    %24 = vector.broadcast %16 : vector<1x128xi32> to vector<3x128xi32>
    %25 = arith.cmpi eq, %24, %17 : vector<3x128xi32>
    %cst_3 = arith.constant 0.000000e+00 : f32
    %26 = vector.shape_cast %4 : vector<1x128xf32> to vector<1x128xf32>
    %27 = vector.broadcast %26 : vector<1x128xf32> to vector<3x128xf32>
    %28 = vector.broadcast %cst_3 : f32 to vector<3x128xf32>
    %29 = arith.select %25, %27, %28 : vector<3x128xi1>, vector<3x128xf32>
    %c0_4 = arith.constant 0 : index
    %c0_5 = arith.constant 0 : index
    %30 = vector.load %arg2[%c0_4, %c0_5] : memref<11x128xf32, #tpu.memory_space<vmem>>, vector<4x128xf32>
    tpu.vector_store %arg2[%c0_4, %c0_5], %3 {strides = array<i32>} : memref<11x128xf32, #tpu.memory_space<vmem>>, vector<4x128xf32>,
    %c4 = arith.constant 4 : index
    %c0_6 = arith.constant 0 : index
    %31 = vector.load %arg2[%c4, %c0_6] : memref<11x128xf32, #tpu.memory_space<vmem>>, vector<3x128xf32>
    tpu.vector_store %arg2[%c4, %c0_6], %23 {strides = array<i32>} : memref<11x128xf32, #tpu.memory_space<vmem>>, vector<3x128xf32>,
    %c7 = arith.constant 7 : index
    %c0_7 = arith.constant 0 : index
    %32 = vector.load %arg2[%c7, %c0_7] : memref<11x128xf32, #tpu.memory_space<vmem>>, vector<3x128xf32>
    tpu.vector_store %arg2[%c7, %c0_7], %29 {strides = array<i32>} : memref<11x128xf32, #tpu.memory_space<vmem>>, vector<3x128xf32>,
    %c10 = arith.constant 10 : index
    %c0_8 = arith.constant 0 : index
    %33 = vector.load %arg2[%c10, %c0_8] : memref<11x128xf32, #tpu.memory_space<vmem>>, vector<1x128xf32>
    tpu.vector_store %arg2[%c10, %c0_8], %4 {strides = array<i32>} : memref<11x128xf32, #tpu.memory_space<vmem>>, vector<1x128xf32>,
    return
  }
  func.func @transform_0(%arg0: i32) -> (i32, i32) {
    %c0_i32 = arith.constant 0 : i32
    %c0_i32_0 = arith.constant 0 : i32
    return %c0_i32, %arg0 : i32, i32
  }
  func.func @transform_1(%arg0: i32) -> (i32, i32) {
    %c0_i32 = arith.constant 0 : i32
    %c0_i32_0 = arith.constant 0 : i32
    return %c0_i32, %arg0 : i32, i32
  }
}

</mosaic_0001>

<llo_original>
// kernel: tpu_custom_call.1
$region0: #{tpu_custom_call.1}
  #allocation0 [shape = 'u32[]', space=smem, size = 0x4, offset = 0x4, fixed_abs, tag = 'smem constant byte address 0x4 - core index']
  #allocation1 [shape = 'u32[144,128]{1,0:T(1,128)}', space=vmem, size = 0x12000, scoped, tag = 'internal scratch']
  %s0 = inlined_call_operand.hbm [shape: f32[6,128], index: 0, kind: input, shape index: {}]
  %s1 = inlined_call_operand.hbm [shape: f32[11,128], index: 1, kind: output, shape index: {}]
  %s2 = sld [smem:[#allocation0]]
  $region18: #{tpu_custom_call.1} parent=0
    _
  %s4 = ssub.s32 1, %s2
  %s5 = scalar_select 0, %s4, %s2
  $region1: #{tpu_custom_call.1} parent=0
    #allocation2 [shape = 'u8[4096]{0}', space=vmem, size = 0x1000, scoped, tag = 'input window, operand 0, single buffered']
    #allocation3 [shape = 's32[1]{0}', space=sflag, size = 0x4, scoped, tag = 'scoped memory for tpu_custom_call.1']
    #allocation4 [shape = 's32[1]{0}', space=sflag, size = 0x4, scoped, tag = 'scoped memory for tpu_custom_call.1']
    #allocation5 [shape = 'u8[8192]{0}', space=vmem, size = 0x2000, scoped, tag = 'output window, operand 0, single buffered']
    %6 = vsyncpa [#allocation3], 0
    %7 = vsyncpa [#allocation4], 0
    // Predicated region
    $region2: #{tpu_custom_call.1} parent=1 // pred_check
      _
    $region3: #{tpu_custom_call.1} parent=1 // pred_check_branch
      %9 = sbr.rel (0) target = $region5
    $region4: #{tpu_custom_call.1} parent=1 // pred_region
      %s11 = ssub.s32 128, 128
      %12 = vsyncadd [#allocation3], %s11
      %s14 = sshll.u32 [#allocation2], 4
      %s15 = int_to_ptr.vmem [resolvable:$true] %s14
      %17 = dma.hbm_to_vmem [thread:$0]  %s0, 128, %s15, [#allocation3]
    $region5: #{tpu_custom_call.1} parent=1 // pred_fallthru
      _
    // Predicated region
    $region6: #{tpu_custom_call.1} parent=1 // pred_check
      _
    $region7: #{tpu_custom_call.1} parent=1 // pred_check_branch
      %19 = sbr.rel (0) target = $region9
    $region8: #{tpu_custom_call.1} parent=1 // pred_region
      %20 = dma.done [#allocation3], 128
    $region9: #{tpu_custom_call.1} parent=1 // pred_fallthru
      _
    %v21 = vld [vmem:[#allocation2] sm:$0x3f]
    %v22 = vmul.f32 %v21, 0.0078125
    %v23 = vcvt.f32.s32.to.zero.pseudo %v21
    %vm24 = vcmp.ge.s32.totalorder %v23, 3
    %v25 = vsel %vm24, 1, 0
    %vm26 = vcmp.ge.s32.totalorder %v23, 6
    %v27 = vsel %vm26, 1, 0
    %v28 = vadd.s32 %v25, %v27
    %v29 = vmul.u32 %v28, 3
    %v30 = vsub.s32 %v23, %v29
    %v31 = vlaneseq
    %v32 = vshrl.u32 %v31, 7
    %v33 = vlaneseq
    %v34 = vshrl.u32 %v33, 7
    %v35 = vsub.s32 5, %v34
    %v36 = vrot.slane %v28, %v35
    %vm37 = vcmp.eq.s32.totalorder %v36, %v32
    %v38 = vlaneseq
    %v39 = vshrl.u32 %v38, 7
    %v40 = vsub.s32 4, %v39
    %v41 = vrot.slane %v21, %v40
    %v42 = vsel %vm37, %v41, 0.0
    %v43 = vlaneseq
    %v44 = vshrl.u32 %v43, 7
    %v45 = vsub.s32 5, %v44
    %v46 = vrot.slane %v30, %v45
    %vm47 = vcmp.eq.s32.totalorder %v46, %v32
    %v48 = vsel %vm47, %v41, 0.0
    %49 = vst [vmem:[#allocation5] sm:$0xf] %v22
    %50 = vst [vmem:[#allocation5 + $0x4] sm:$0x7] %v42
    %51 = vst [vmem:[#allocation5 + $0x7] sm:$0x7] %v48
    %52 = vst [vmem:[#allocation5 + $0x6] sm:$0x10] %v21
    // Predicated region
    $region10: #{tpu_custom_call.1} parent=1 // pred_check
      _
    $region11: #{tpu_custom_call.1} parent=1 // pred_check_branch
      %54 = sbr.rel (0) target = $region13
    $region12: #{tpu_custom_call.1} parent=1 // pred_region
      %s56 = ssub.s32 256, 256
      %57 = vsyncadd [#allocation4], %s56
      %s58 = sshll.u32 [#allocation5], 4
      %s59 = int_to_ptr.vmem [resolvable:$true] %s58
      %64 = dma.vmem_to_hbm [thread:$0]  %s59, 256, %s1, [#allocation4], 128, 128, 8
    $region13: #{tpu_custom_call.1} parent=1 // pred_fallthru
      _
    // Predicated region
    $region14: #{tpu_custom_call.1} parent=1 // pred_check
      _
    $region15: #{tpu_custom_call.1} parent=1 // pred_check_branch
      %66 = sbr.rel (0) target = $region17
    $region16: #{tpu_custom_call.1} parent=1 // pred_region
      %67 = dma.done [#allocation4], 256
    $region17: #{tpu_custom_call.1} parent=1 // pred_fallthru
      _
    %68 = vsyncpa [#allocation3], 1
    %69 = vsyncpa [#allocation4], 1

</llo_original>
